<compile_context>
chip_gen: v7x
topology: tpu7x:2x2x1
jax: 0.10.0
libtpu: 0.0.40
codegen_flags: <defaults>
</compile_context>

<pallas_src>
import jax
import jax.numpy as jnp
from jax.experimental import pallas as pl
from jax.experimental.pallas import tpu as pltpu


def critic_kernel(x_ref, w1_ref, b1_ref, w2_ref, b2_ref, o_ref):
    # Transposed, lane-dense layout: batch is the 128-lane axis.
    #   x: (F, TB)   w1: (H, F)   b1: (H, 1)   w2: (H, 1)   b2: (1, 1)   o: (1, TB)
    x = x_ref[...]                     # (F, TB) f32
    w1 = w1_ref[...]                   # (H, F)
    F = x.shape[0]
    H = w1.shape[0]
    TB = x.shape[1]

    # fc1 on the VPU: K = F is tiny, so a handful of unrolled FMAs beats a
    # (TB,4)x(4,20) MXU pass that would be pure fill/drain latency.
    h = jnp.broadcast_to(b1_ref[...], (H, TB))          # bias, hoisted broadcast
    for k in range(F):                                   # static, fully unrolled (F == 4)
        h = h + w1[:, k:k + 1] * x[k:k + 1, :]           # (H,1)*(1,TB) -> (H,TB)
    h = jnp.maximum(h, 0.0)                              # ReLU

    # fc2 (N = 1) as a VPU multiply + sublane reduce instead of an MXU matmul.
    out = jnp.sum(h * w2_ref[...], axis=0, keepdims=True) + b2_ref[...]   # (1, TB)
    o_ref[...] = out.astype(o_ref.dtype)


def _round_up(n, m):
    return ((n + m - 1) // m) * m


def critic_forward(x, w1, b1, w2, b2, *, block_b=1024):
    """x: (B, F) f32; w1: (H, F); b1: (H,); w2: (1, H); b2: (1,). Returns (B, 1) f32."""
    B, F = x.shape
    H = w1.shape[0]

    # Batch tile on the lane axis: multiple of 128, capped at block_b, at least one tile.
    tb = _round_up(min(block_b, _round_up(B, 128)), 128)
    Bp = _round_up(B, tb)
    grid = (Bp // tb,)

    # Lane-dense layout: batch -> lanes. Pad batch with zeros (sliced off afterwards).
    x_t = jnp.zeros((F, Bp), x.dtype).at[:, :B].set(x.T)
    b1c = b1.reshape(H, 1)
    w2c = w2.reshape(H, 1)
    b2c = b2.reshape(1, 1)

    out_t = pl.pallas_call(
        critic_kernel,
        out_shape=jax.ShapeDtypeStruct((1, Bp), jnp.float32),
        grid_spec=pltpu.PrefetchScalarGridSpec(
            num_scalar_prefetch=0,
            grid=grid,
            in_specs=[
                pl.BlockSpec((F, tb), lambda i: (0, i)),   # streamed batch tile
                pl.BlockSpec((H, F), lambda i: (0, 0)),    # weights: constant block index
                pl.BlockSpec((H, 1), lambda i: (0, 0)),    #   -> held resident, no re-DMA
                pl.BlockSpec((H, 1), lambda i: (0, 0)),
                pl.BlockSpec((1, 1), lambda i: (0, 0)),
            ],
            out_specs=pl.BlockSpec((1, tb), lambda i: (0, i)),  # lane-dense output slab
        ),
        compiler_params=pltpu.CompilerParams(
            dimension_semantics=("parallel",),             # batch tiles across TCs (v7x)
        ),
    )(x_t, w1, b1c, w2c, b2c)

    return out_t[0, :B].reshape(B, 1)
    # TODO(synk): optional bf16 transport of x for v6e/v7x (keep f32 accumulation).


def init_params(key, n_features, hidden=20):
    # Deterministic synthetic init (mimics PyTorch Linear's uniform(-1/sqrt(fan_in), ...)),
    # stored in the PyTorch layout: weight (out, in), bias (out,).
    k1, k2, k3, k4 = jax.random.split(key, 4)
    lim1 = 1.0 / jnp.sqrt(jnp.float32(n_features))
    lim2 = 1.0 / jnp.sqrt(jnp.float32(hidden))
    w1 = jax.random.uniform(k1, (hidden, n_features), jnp.float32, -lim1, lim1)
    b1 = jax.random.uniform(k2, (hidden,), jnp.float32, -lim1, lim1)
    w2 = jax.random.uniform(k3, (1, hidden), jnp.float32, -lim2, lim2)
    b2 = jax.random.uniform(k4, (1,), jnp.float32, -lim2, lim2)
    return w1, b1, w2, b2


def _reference(x, w1, b1, w2, b2):
    # Same math as the PyTorch forward: relu(x @ W1^T + b1) @ W2^T + b2
    return jnp.maximum(x @ w1.T + b1[None, :], 0.0) @ w2.T + b2[None, :]


if __name__ == "__main__":
    key = jax.random.PRNGKey(0)
    kx, kb, kp = jax.random.split(key, 3)

    batch, n_features = 2, 4
    w1, b1, w2, b2 = init_params(kp, n_features)

    # Small-batch path (single tile, padded to one 128-lane block).
    x = jax.random.normal(kx, (batch, n_features), jnp.float32)
    out = jax.block_until_ready(critic_forward(x, w1, b1, w2, b2))
    ref = _reference(x, w1, b1, w2, b2)
    assert out.shape == (batch, 1)
    assert jnp.allclose(out, ref, atol=1e-5), (out, ref)

    # Multi-tile grid path (B=300 padded to 384, 3 batch tiles of 128 lanes).
    xb = jax.random.normal(kb, (300, n_features), jnp.float32)
    outb = jax.block_until_ready(critic_forward(xb, w1, b1, w2, b2, block_b=128))
    refb = _reference(xb, w1, b1, w2, b2)
    assert outb.shape == (300, 1)
    assert jnp.allclose(outb, refb, atol=1e-5)

    print("KERNEL_OK")
</pallas_src>

<mosaic_0001>
module attributes {stable_mosaic.version = 11 : i64} {
  func.func @critic_kernel(%arg0: i32, %arg1: memref<4x128xf32, #tpu.memory_space<vmem>>, %arg2: memref<20x4xf32, #tpu.memory_space<vmem>>, %arg3: memref<20x1xf32, #tpu.memory_space<vmem>>, %arg4: memref<20x1xf32, #tpu.memory_space<vmem>>, %arg5: memref<1x1xf32, #tpu.memory_space<vmem>>, %arg6: memref<1x128xf32, #tpu.memory_space<vmem>>) attributes {dimension_semantics = [#tpu.dimension_semantics<parallel>], iteration_bounds = array<i64: 1>, scalar_prefetch = 0 : i64, scratch_operands = 0 : i64, tpu.core_type = #tpu.core_type<tc>, window_params = [{transform_indices = @transform_0, window_bounds = array<i64: 4, 128>}, {pipeline_mode = #tpu.pipeline_mode<synchronous>, transform_indices = @transform_1, window_bounds = array<i64: 20, 4>}, {pipeline_mode = #tpu.pipeline_mode<synchronous>, transform_indices = @transform_2, window_bounds = array<i64: 20, 1>}, {pipeline_mode = #tpu.pipeline_mode<synchronous>, transform_indices = @transform_3, window_bounds = array<i64: 20, 1>}, {pipeline_mode = #tpu.pipeline_mode<synchronous>, transform_indices = @transform_4, window_bounds = array<i64: 1, 1>}, {transform_indices = @transform_5, window_bounds = array<i64: 1, 128>}]} {
    %c0 = arith.constant 0 : index
    %c0_0 = arith.constant 0 : index
    %0 = vector.load %arg1[%c0, %c0_0] : memref<4x128xf32, #tpu.memory_space<vmem>>, vector<4x128xf32>
    %c0_1 = arith.constant 0 : index
    %c0_2 = arith.constant 0 : index
    %1 = vector.load %arg2[%c0_1, %c0_2] : memref<20x4xf32, #tpu.memory_space<vmem>>, vector<20x4xf32>
    %c0_3 = arith.constant 0 : index
    %c0_4 = arith.constant 0 : index
    %2 = vector.load %arg3[%c0_3, %c0_4] : memref<20x1xf32, #tpu.memory_space<vmem>>, vector<20x1xf32>
    %3 = vector.shape_cast %2 : vector<20x1xf32> to vector<20x1xf32>
    %4 = vector.broadcast %3 : vector<20x1xf32> to vector<20x128xf32>
    %5 = vector.extract_strided_slice %1 {offsets = [0, 0], sizes = [20, 1], strides = [1, 1]} : vector<20x4xf32> to vector<20x1xf32>
    %6 = vector.extract_strided_slice %0 {offsets = [0, 0], sizes = [1, 128], strides = [1, 1]} : vector<4x128xf32> to vector<1x128xf32>
    %7 = vector.broadcast %5 : vector<20x1xf32> to vector<20x128xf32>
    %8 = vector.broadcast %6 : vector<1x128xf32> to vector<20x128xf32>
    %9 = arith.mulf %7, %8 : vector<20x128xf32>
    %10 = arith.addf %4, %9 : vector<20x128xf32>
    %11 = vector.extract_strided_slice %1 {offsets = [0, 1], sizes = [20, 1], strides = [1, 1]} : vector<20x4xf32> to vector<20x1xf32>
    %12 = vector.extract_strided_slice %0 {offsets = [1, 0], sizes = [1, 128], strides = [1, 1]} : vector<4x128xf32> to vector<1x128xf32>
    %13 = vector.broadcast %11 : vector<20x1xf32> to vector<20x128xf32>
    %14 = vector.broadcast %12 : vector<1x128xf32> to vector<20x128xf32>
    %15 = arith.mulf %13, %14 : vector<20x128xf32>
    %16 = arith.addf %10, %15 : vector<20x128xf32>
    %17 = vector.extract_strided_slice %1 {offsets = [0, 2], sizes = [20, 1], strides = [1, 1]} : vector<20x4xf32> to vector<20x1xf32>
    %18 = vector.extract_strided_slice %0 {offsets = [2, 0], sizes = [1, 128], strides = [1, 1]} : vector<4x128xf32> to vector<1x128xf32>
    %19 = vector.broadcast %17 : vector<20x1xf32> to vector<20x128xf32>
    %20 = vector.broadcast %18 : vector<1x128xf32> to vector<20x128xf32>
    %21 = arith.mulf %19, %20 : vector<20x128xf32>
    %22 = arith.addf %16, %21 : vector<20x128xf32>
    %23 = vector.extract_strided_slice %1 {offsets = [0, 3], sizes = [20, 1], strides = [1, 1]} : vector<20x4xf32> to vector<20x1xf32>
    %24 = vector.extract_strided_slice %0 {offsets = [3, 0], sizes = [1, 128], strides = [1, 1]} : vector<4x128xf32> to vector<1x128xf32>
    %25 = vector.broadcast %23 : vector<20x1xf32> to vector<20x128xf32>
    %26 = vector.broadcast %24 : vector<1x128xf32> to vector<20x128xf32>
    %27 = arith.mulf %25, %26 : vector<20x128xf32>
    %28 = arith.addf %22, %27 : vector<20x128xf32>
    %cst = arith.constant 0.000000e+00 : f32
    %29 = vector.broadcast %cst : f32 to vector<20x128xf32>
    %30 = arith.maximumf %28, %29 : vector<20x128xf32>
    %c0_5 = arith.constant 0 : index
    %c0_6 = arith.constant 0 : index
    %31 = vector.load %arg4[%c0_5, %c0_6] : memref<20x1xf32, #tpu.memory_space<vmem>>, vector<20x1xf32>
    %32 = vector.broadcast %31 : vector<20x1xf32> to vector<20x128xf32>
    %33 = arith.mulf %30, %32 : vector<20x128xf32>
    %cst_7 = arith.constant dense<0.000000e+00> : vector<128xf32>
    %34 = vector.multi_reduction <add>, %33, %cst_7 [0] : vector<20x128xf32> to vector<128xf32>
    %35 = vector.shape_cast %34 : vector<128xf32> to vector<1x128xf32>
    %c0_8 = arith.constant 0 : index
    %c0_9 = arith.constant 0 : index
    %36 = vector.load %arg5[%c0_8, %c0_9] : memref<1x1xf32, #tpu.memory_space<vmem>>, vector<1x1xf32>
    %37 = vector.broadcast %36 : vector<1x1xf32> to vector<1x128xf32>
    %38 = arith.addf %35, %37 : vector<1x128xf32>
    %c0_10 = arith.constant 0 : index
    %c0_11 = arith.constant 0 : index
    %39 = vector.load %arg6[%c0_10, %c0_11] : memref<1x128xf32, #tpu.memory_space<vmem>>, vector<1x128xf32>
    tpu.vector_store %arg6[%c0_10, %c0_11], %38 {strides = array<i32>} : memref<1x128xf32, #tpu.memory_space<vmem>>, vector<1x128xf32>,
    return
  }
  func.func @transform_0(%arg0: i32) -> (i32, i32) {
    %c0_i32 = arith.constant 0 : i32
    %c0_i32_0 = arith.constant 0 : i32
    return %c0_i32, %arg0 : i32, i32
  }
  func.func @transform_1(%arg0: i32) -> (i32, i32) {
    %c0_i32 = arith.constant 0 : i32
    %c0_i32_0 = arith.constant 0 : i32
    %c0_i32_1 = arith.constant 0 : i32
    return %c0_i32, %c0_i32_0 : i32, i32
  }
  func.func @transform_2(%arg0: i32) -> (i32, i32) {
    %c0_i32 = arith.constant 0 : i32
    %c0_i32_0 = arith.constant 0 : i32
    %c0_i32_1 = arith.constant 0 : i32
    return %c0_i32, %c0_i32_0 : i32, i32
  }
  func.func @transform_3(%arg0: i32) -> (i32, i32) {
    %c0_i32 = arith.constant 0 : i32
    %c0_i32_0 = arith.constant 0 : i32
    %c0_i32_1 = arith.constant 0 : i32
    return %c0_i32, %c0_i32_0 : i32, i32
  }
  func.func @transform_4(%arg0: i32) -> (i32, i32) {
    %c0_i32 = arith.constant 0 : i32
    %c0_i32_0 = arith.constant 0 : i32
    %c0_i32_1 = arith.constant 0 : i32
    return %c0_i32, %c0_i32_0 : i32, i32
  }
  func.func @transform_5(%arg0: i32) -> (i32, i32) {
    %c0_i32 = arith.constant 0 : i32
    %c0_i32_0 = arith.constant 0 : i32
    return %c0_i32, %arg0 : i32, i32
  }
}

</mosaic_0001>

<llo_original>
// kernel: tpu_custom_call.1
$region0: #{tpu_custom_call.1}
  #allocation0 [shape = 'u32[]', space=smem, size = 0x4, offset = 0x4, fixed_abs, tag = 'smem constant byte address 0x4 - core index']
  #allocation1 [shape = 'u32[144,128]{1,0:T(1,128)}', space=vmem, size = 0x12000, scoped, tag = 'internal scratch']
  #allocation2 [shape = 'f32[1,1]{1,0:T(1,128)S(1)}', space=vmem, size = 0x200, scoped, tag = 'scoped memory for tpu_custom_call.1']
  %s0 = inlined_call_operand.vmem [shape: f32[4,128], index: 0, kind: input, shape index: {}]
  %s1 = inlined_call_operand.vmem [shape: f32[20,4], index: 1, kind: input, shape index: {}]
  %s2 = inlined_call_operand.vmem [shape: f32[20,1], index: 2, kind: input, shape index: {}]
  %s3 = inlined_call_operand.vmem [shape: f32[20,1], index: 3, kind: input, shape index: {}]
  %s4 = inlined_call_operand.<no memory space> [shape: f32[1,1], index: 4, kind: input, shape index: {}]
  %s5 = inlined_call_operand.hbm [shape: f32[1,128], index: 5, kind: output, shape index: {}]
  %s6 = sld [smem:[#allocation0]]
  $region30: #{tpu_custom_call.1} parent=0
    _
  %s8 = ssub.s32 1, %s6
  %s9 = scalar_select 0, %s8, %s6
  %v10 = vstv %s4
  %11 = vst [vmem:[#allocation2] sm:$0x1] %v10
  $region1: #{tpu_custom_call.1} parent=0
    #allocation3 [shape = 'u8[512]{0}', space=vmem, size = 0x400, scoped, tag = 'output window, operand 0, single buffered']
    #allocation4 [shape = 's32[1]{0}', space=sflag, size = 0x4, scoped, tag = 'scoped memory for tpu_custom_call.1']
    %12 = vsyncpa [#allocation4], 0
    // Predicated region
    $region2: #{tpu_custom_call.1} parent=1 // pred_check
      _
    $region3: #{tpu_custom_call.1} parent=1 // pred_check_branch
      %14 = sbr.rel (0) target = $region5
    $region4: #{tpu_custom_call.1} parent=1 // pred_region
      _
    $region5: #{tpu_custom_call.1} parent=1 // pred_fallthru
      _
    // Predicated region
    $region6: #{tpu_custom_call.1} parent=1 // pred_check
      _
    $region7: #{tpu_custom_call.1} parent=1 // pred_check_branch
      %16 = sbr.rel (0) target = $region9
    $region8: #{tpu_custom_call.1} parent=1 // pred_region
      _
    $region9: #{tpu_custom_call.1} parent=1 // pred_fallthru
      _
    // Predicated region
    $region10: #{tpu_custom_call.1} parent=1 // pred_check
      _
    $region11: #{tpu_custom_call.1} parent=1 // pred_check_branch
      %18 = sbr.rel (0) target = $region13
    $region12: #{tpu_custom_call.1} parent=1 // pred_region
      _
    $region13: #{tpu_custom_call.1} parent=1 // pred_fallthru
      _
    // Predicated region
    $region14: #{tpu_custom_call.1} parent=1 // pred_check
      _
    $region15: #{tpu_custom_call.1} parent=1 // pred_check_branch
      %20 = sbr.rel (0) target = $region17
    $region16: #{tpu_custom_call.1} parent=1 // pred_region
      _
    $region17: #{tpu_custom_call.1} parent=1 // pred_fallthru
      _
    // Predicated region
    $region18: #{tpu_custom_call.1} parent=1 // pred_check
      _
    $region19: #{tpu_custom_call.1} parent=1 // pred_check_branch
      %22 = sbr.rel (0) target = $region21
    $region20: #{tpu_custom_call.1} parent=1 // pred_region
      _
    $region21: #{tpu_custom_call.1} parent=1 // pred_fallthru
      _
    %v23 = vld [vmem:[%s0] sm:$0xf]
    %v24 = vld [vmem:[%s1] sm:$0xff]
    %v25 = vld [vmem:[%s1 + $0x8] sm:$0xff]
    %v26 = vld [vmem:[%s1 + $0x10] sm:$0xf]
    %v27 = vld [vmem:[%s2] sm:$0xff]
    %v28 = vld [vmem:[%s2 + $0x8] sm:$0xff]
    %v29 = vld [vmem:[%s2 + $0x10] sm:$0xf]
    %31 = vset.pattern.permute.xlu0 0
    %32 = vperm.xlu0 %31, %v27
    %v33 = vpop.permute.xlu0 %32
    %36 = vset.pattern.permute.xlu0 0
    %37 = vperm.xlu0 %36, %v28
    %v38 = vpop.permute.xlu0 %37
    %41 = vset.pattern.permute.xlu0 0
    %42 = vperm.xlu0 %41, %v29
    %v43 = vpop.permute.xlu0 %42
    %46 = vset.pattern.permute.xlu0 0
    %47 = vperm.xlu0 %46, %v24
    %v48 = vpop.permute.xlu0 %47
    %51 = vset.pattern.permute.xlu0 0
    %52 = vperm.xlu0 %51, %v25
    %v53 = vpop.permute.xlu0 %52
    %56 = vset.pattern.permute.xlu0 0
    %57 = vperm.xlu0 %56, %v26
    %v58 = vpop.permute.xlu0 %57
    %v60 = vlaneseq
    %v61 = vshrl.u32 %v60, 7
    %v62 = vsub.s32 0, %v61
    %v63 = vrot.slane %v23, %v62
    %v64 = vmul.f32 %v48, %v63
    %v65 = vmul.f32 %v53, %v63
    %v66 = vmul.f32 %v58, %v63
    %v67 = vadd.f32 %v33, %v64
    %v68 = vadd.f32 %v38, %v65
    %v69 = vadd.f32 %v43, %v66
    %70 = vset.pattern.permute.xlu0 1
    %71 = vperm.xlu0 %70, %v24
    %v72 = vpop.permute.xlu0 %71
    %74 = vset.pattern.permute.xlu0 1
    %75 = vperm.xlu0 %74, %v25
    %v76 = vpop.permute.xlu0 %75
    %78 = vset.pattern.permute.xlu0 1
    %79 = vperm.xlu0 %78, %v26
    %v80 = vpop.permute.xlu0 %79
    %v82 = vlaneseq
    %v83 = vshrl.u32 %v82, 7
    %v84 = vsub.s32 1, %v83
    %v85 = vrot.slane %v23, %v84
    %v86 = vmul.f32 %v72, %v85
    %v87 = vmul.f32 %v76, %v85
    %v88 = vmul.f32 %v80, %v85
    %v89 = vadd.f32 %v67, %v86
    %v90 = vadd.f32 %v68, %v87
    %v91 = vadd.f32 %v69, %v88
    %92 = vset.pattern.permute.xlu0 2
    %93 = vperm.xlu0 %92, %v24
    %v94 = vpop.permute.xlu0 %93
    %96 = vset.pattern.permute.xlu0 2
    %97 = vperm.xlu0 %96, %v25
    %v98 = vpop.permute.xlu0 %97
    %100 = vset.pattern.permute.xlu0 2
    %101 = vperm.xlu0 %100, %v26
    %v102 = vpop.permute.xlu0 %101
    %v104 = vlaneseq
    %v105 = vshrl.u32 %v104, 7
    %v106 = vsub.s32 2, %v105
    %v107 = vrot.slane %v23, %v106
    %v108 = vmul.f32 %v94, %v107
    %v109 = vmul.f32 %v98, %v107
    %v110 = vmul.f32 %v102, %v107
    %v111 = vadd.f32 %v89, %v108
    %v112 = vadd.f32 %v90, %v109
    %v113 = vadd.f32 %v91, %v110
    %114 = vset.pattern.permute.xlu0 3
    %115 = vperm.xlu0 %114, %v24
    %v116 = vpop.permute.xlu0 %115
    %118 = vset.pattern.permute.xlu0 3
    %119 = vperm.xlu0 %118, %v25
    %v120 = vpop.permute.xlu0 %119
    %122 = vset.pattern.permute.xlu0 3
    %123 = vperm.xlu0 %122, %v26
    %v124 = vpop.permute.xlu0 %123
    %v126 = vlaneseq
    %v127 = vshrl.u32 %v126, 7
    %v128 = vsub.s32 3, %v127
    %v129 = vrot.slane %v23, %v128
    %v130 = vmul.f32 %v116, %v129
    %v131 = vmul.f32 %v120, %v129
    %v132 = vmul.f32 %v124, %v129
    %v133 = vadd.f32 %v111, %v130
    %v134 = vadd.f32 %v112, %v131
    %v135 = vadd.f32 %v113, %v132
    %v136 = vmax.f32 %v133, 0.0
    %v137 = vmax.f32 %v134, 0.0
    %v138 = vmax.f32 %v135, 0.0
    %v139 = vld [vmem:[%s3] sm:$0xff]
    %v140 = vld [vmem:[%s3 + $0x8] sm:$0xff]
    %v141 = vld [vmem:[%s3 + $0x10] sm:$0xf]
    %143 = vset.pattern.permute.xlu0 0
    %144 = vperm.xlu0 %143, %v139
    %v145 = vpop.permute.xlu0 %144
    %148 = vset.pattern.permute.xlu0 0
    %149 = vperm.xlu0 %148, %v140
    %v150 = vpop.permute.xlu0 %149
    %153 = vset.pattern.permute.xlu0 0
    %154 = vperm.xlu0 %153, %v141
    %v155 = vpop.permute.xlu0 %154
    %v157 = vmul.f32 %v136, %v145
    %v158 = vmul.f32 %v137, %v150
    %v159 = vmul.f32 %v138, %v155
    %v160 = vadd.f32 %v157, %v158
    %vm161 = vcmask 1043456
    %v162 = vsel %vm161, %v159, 0.0
    %v163 = vadd.f32 %v160, %v162
    %v164 = vrot.slane %v163, 4
    %v165 = vadd.f32 %v163, %v164
    %v166 = vrot.slane %v165, 2
    %v167 = vadd.f32 %v165, %v166
    %v168 = vrot.slane %v167, 1
    %v169 = vadd.f32 %v167, %v168
    %v170 = vld [vmem:[#allocation2] sm:$0x1]
    %172 = vset.pattern.permute.xlu0 0
    %173 = vperm.xlu0 %172, %v170
    %v174 = vpop.permute.xlu0 %173
    %v176 = vlaneseq
    %v177 = vshrl.u32 %v176, 7
    %v178 = vsub.s32 0, %v177
    %v179 = vrot.slane %v174, %v178
    %v180 = vadd.f32 %v169, %v179
    %181 = vst [vmem:[#allocation3] sm:$0x1] %v180
    // Predicated region
    $region22: #{tpu_custom_call.1} parent=1 // pred_check
      _
    $region23: #{tpu_custom_call.1} parent=1 // pred_check_branch
      %183 = sbr.rel (0) target = $region25
    $region24: #{tpu_custom_call.1} parent=1 // pred_region
      %s185 = ssub.s32 16, 16
      %186 = vsyncadd [#allocation4], %s185
      %s188 = sshll.u32 [#allocation3], 4
      %s189 = int_to_ptr.vmem [resolvable:$true] %s188
      %191 = dma.vmem_to_hbm [thread:$0]  %s189, 16, %s5, [#allocation4]
    $region25: #{tpu_custom_call.1} parent=1 // pred_fallthru
      _
    // Predicated region
    $region26: #{tpu_custom_call.1} parent=1 // pred_check
      _
    $region27: #{tpu_custom_call.1} parent=1 // pred_check_branch
      %193 = sbr.rel (0) target = $region29
    $region28: #{tpu_custom_call.1} parent=1 // pred_region
      %194 = dma.done [#allocation4], 16
    $region29: #{tpu_custom_call.1} parent=1 // pred_fallthru
      _
    %195 = vsyncpa [#allocation4], 1

</llo_original>
